<compile_context>
chip_gen: v6e
topology: v6e:2x2x1
jax: 0.10.0
libtpu: 0.0.40
codegen_flags: <defaults>
</compile_context>

<pallas_src>
import functools

import jax
import jax.numpy as jnp
from jax import lax
from jax.experimental import pallas as pl
from jax.experimental.pallas import tpu as pltpu


# ----------------------------------------------------------------------------
# Fused kernel: input projection (K-tiled streaming matmul) + bidirectional
# recurrence in the epilogue of the last K step.
#   x_ref:     (TB, tk)   bf16  K-tile of the time-major flattened inputs
#   w_ref:     (tk, 8H)   bf16  K-tile of [W_ih_fwd | W_ih_bwd]
#   b_ref:     (1, 8H)    f32   combined biases  [b_fwd | b_bwd]
#   whh_f_ref: (H, 4H)    bf16  fused recurrent weights, gate order (i, f, g, o)
#   whh_b_ref: (H, 4H)    bf16
#   out_ref:   (T, B, 2H) f32   [..., :H] forward, [..., H:] backward
#   acc_ref:   (TB, 8H)   f32   VMEM accumulator across the K grid axis
# ----------------------------------------------------------------------------
def bilstm_fused_kernel(x_ref, w_ref, b_ref, whh_f_ref, whh_b_ref,
                        out_ref, acc_ref):
    T, B, H2 = out_ref.shape
    H = H2 // 2
    H4 = 4 * H

    @pl.when(pl.program_id(0) == 0)
    def _():
        # Fold the combined biases into the accumulator initialization.
        acc_ref[...] = jnp.broadcast_to(b_ref[...], acc_ref.shape)

    acc_ref[...] += jnp.dot(x_ref[...], w_ref[...],
                            preferred_element_type=jnp.float32)

    @pl.when(pl.program_id(0) == pl.num_programs(0) - 1)
    def _():
        # Hoist loop-invariant recurrent weight loads out of the recurrence.
        whh_f = whh_f_ref[...]
        whh_b = whh_b_ref[...]

        def cell(pre, h, c, whh):
            # One fused (B, H) x (H, 4H) bf16 matmul for all 4 gates, f32 acc.
            gates = pre + jnp.dot(h.astype(whh.dtype), whh,
                                  preferred_element_type=jnp.float32)
            i = jax.nn.sigmoid(gates[:, 0 * H:1 * H])
            f = jax.nn.sigmoid(gates[:, 1 * H:2 * H])
            g = jnp.tanh(gates[:, 2 * H:3 * H])
            o = jax.nn.sigmoid(gates[:, 3 * H:4 * H])
            c_new = f * c + i * g
            h_new = o * jnp.tanh(c_new)
            return h_new, c_new

        z = jnp.zeros((B, H), jnp.float32)
        hf = cf = hb = cb = z

        # T is tiny (3 at full size): static unroll with static, tile-aligned
        # Ref slices.  Forward (t = s) and backward (t = T-1-s) chains are
        # interleaved so the two serial dependence chains overlap.
        for s in range(T):
            tb = T - 1 - s
            pre_f = acc_ref[s * B:(s + 1) * B, :H4]
            pre_b = acc_ref[tb * B:(tb + 1) * B, H4:]
            hf, cf = cell(pre_f, hf, cf, whh_f)
            hb, cb = cell(pre_b, hb, cb, whh_b)
            out_ref[s, :, :H] = hf
            out_ref[tb, :, H:] = hb


def _choose_k_tile(D, G, itemsize=2, budget_bytes=20 * 1024 * 1024):
    """Largest 128-multiple divisor of D whose double-buffered (tk, G) weight
    tile fits within `budget_bytes`; falls back to the full dimension."""
    best = None
    for mult in range(1, D // 128 + 1):
        tk = 128 * mult
        if D % tk:
            continue
        if 2 * tk * G * itemsize <= budget_bytes:
            best = tk
    if best is None:
        best = D          # full-extent block is always legal
    return best


@functools.partial(jax.jit, static_argnames=("hidden",))
def lstm_block_forward(x, params, *, hidden):
    """Matches LSTM_block.forward.  x: (B, C, T, W) -> (B, T, 2H)."""
    B, C, T, W = x.shape
    D = C * W
    H = hidden
    wih_f, whh_f, b_f, wih_b, whh_b, b_b = params  # (D,4H),(H,4H),(1,4H) x 2

    # Glue: permute(0,2,1,3).reshape(B,T,C*W), then time-major flatten (T*B, D).
    x_temp = jnp.transpose(x, (0, 2, 1, 3)).reshape(B, T, D)
    x_flat = jnp.transpose(x_temp, (1, 0, 2)).reshape(T * B, D)
    x_flat = x_flat.astype(jnp.bfloat16)

    # Stack both directions on the lane axis: (D, 8H) weights, (1, 8H) bias.
    w_ih_all = jnp.concatenate([wih_f, wih_b], axis=1).astype(jnp.bfloat16)
    b_all = jnp.concatenate([b_f, b_b], axis=1).astype(jnp.float32)

    TB = T * B
    G = 8 * H
    tk = _choose_k_tile(D, G)
    nk = D // tk if D % tk == 0 else 1

    out_tm = pl.pallas_call(
        bilstm_fused_kernel,
        grid=(nk,),
        in_specs=[
            pl.BlockSpec((TB, tk), lambda k: (0, k)),
            pl.BlockSpec((tk, G), lambda k: (k, 0)),
            pl.BlockSpec((1, G), lambda k: (0, 0)),
            pl.BlockSpec((H, 4 * H), lambda k: (0, 0)),
            pl.BlockSpec((H, 4 * H), lambda k: (0, 0)),
        ],
        out_specs=pl.BlockSpec((T, B, 2 * H), lambda k: (0, 0, 0)),
        out_shape=jax.ShapeDtypeStruct((T, B, 2 * H), jnp.float32),
        scratch_shapes=[pltpu.VMEM((TB, G), jnp.float32)],
        compiler_params=pltpu.CompilerParams(
            dimension_semantics=("arbitrary",)),
    )(x_flat, w_ih_all, b_all,
      whh_f.astype(jnp.bfloat16), whh_b.astype(jnp.bfloat16))

    return jnp.transpose(out_tm, (1, 0, 2))  # (B, T, 2H)
    # TODO(synk): on v7x the forward/backward directions could additionally be
    # split across the two TensorCores (grid over direction, "parallel");
    # single-core interleaving is used here since v5e/v6e have one TC.


def lstm_block_reference(x, params, *, hidden):
    """Pure-JAX reference with the same bf16 matmul / f32 state policy."""
    B, C, T, W = x.shape
    D = C * W
    H = hidden
    wih_f, whh_f, b_f, wih_b, whh_b, b_b = params
    x_tm = jnp.transpose(jnp.transpose(x, (0, 2, 1, 3)).reshape(B, T, D),
                         (1, 0, 2)).astype(jnp.bfloat16)

    def direction(xs, wih, whh, b):
        wih16 = wih.astype(jnp.bfloat16)
        whh16 = whh.astype(jnp.bfloat16)
        pre = jnp.einsum("tbd,dg->tbg", xs, wih16,
                         preferred_element_type=jnp.float32) + b

        def scan_fn(carry, pre_t):
            h, c = carry
            gates = pre_t + jnp.dot(h.astype(jnp.bfloat16), whh16,
                                    preferred_element_type=jnp.float32)
            i = jax.nn.sigmoid(gates[:, :H])
            f = jax.nn.sigmoid(gates[:, H:2 * H])
            g = jnp.tanh(gates[:, 2 * H:3 * H])
            o = jax.nn.sigmoid(gates[:, 3 * H:])
            c = f * c + i * g
            h = o * jnp.tanh(c)
            return (h, c), h

        h0 = jnp.zeros((B, H), jnp.float32)
        (_, _), hs = lax.scan(scan_fn, (h0, h0), pre)
        return hs

    hs_f = direction(x_tm, wih_f, whh_f, b_f)                # (T, B, H)
    hs_b = direction(x_tm[::-1], wih_b, whh_b, b_b)[::-1]    # (T, B, H)
    out = jnp.concatenate([hs_f, hs_b], axis=-1)
    return jnp.transpose(out, (1, 0, 2))


def make_params(key, D, H):
    """PyTorch-style uniform(-1/sqrt(H), 1/sqrt(H)); gate order (i, f, g, o)."""
    ks = jax.random.split(key, 8)
    s = 1.0 / jnp.sqrt(jnp.float32(H))

    def u(k, shape):
        return jax.random.uniform(k, shape, minval=-s, maxval=s,
                                  dtype=jnp.float32)

    wih_f = u(ks[0], (D, 4 * H))
    whh_f = u(ks[1], (H, 4 * H))
    b_f = u(ks[2], (1, 4 * H)) + u(ks[3], (1, 4 * H))   # b_ih + b_hh
    wih_b = u(ks[4], (D, 4 * H))
    whh_b = u(ks[5], (H, 4 * H))
    b_b = u(ks[6], (1, 4 * H)) + u(ks[7], (1, 4 * H))
    return (wih_f, whh_f, b_f, wih_b, whh_b, b_b)


if __name__ == "__main__":
    # Scaled-down shapes (full-size module: B=8, C=128, T=3, W=63, H=256).
    B, C, T, W = 8, 16, 3, 8
    D = C * W        # 128
    H = 64           # 2H = 128 -> lane-dense output even at the small size

    key = jax.random.PRNGKey(0)
    k_x, k_p = jax.random.split(key)
    x = jax.random.normal(k_x, (B, C, T, W), dtype=jnp.float32)
    params = make_params(k_p, D, H)

    out = lstm_block_forward(x, params, hidden=H)
    out = jax.block_until_ready(out)
    assert out.shape == (B, T, 2 * H), out.shape

    ref = lstm_block_reference(x, params, hidden=H)
    err = float(jnp.max(jnp.abs(out - ref)))
    assert err < 1e-2, err   # bf16 matmuls, f32 accumulation/state
    print("KERNEL_OK")
</pallas_src>

<mosaic_0001>
module attributes {stable_mosaic.version = 11 : i64} {
  func.func @bilstm_fused_kernel(%arg0: i32, %arg1: memref<24x128xbf16, #tpu.memory_space<vmem>>, %arg2: memref<128x512xbf16, #tpu.memory_space<vmem>>, %arg3: memref<1x512xf32, #tpu.memory_space<vmem>>, %arg4: memref<64x256xbf16, #tpu.memory_space<vmem>>, %arg5: memref<64x256xbf16, #tpu.memory_space<vmem>>, %arg6: memref<3x8x128xf32, #tpu.memory_space<vmem>>, %arg7: memref<24x512xf32, #tpu.memory_space<vmem>>) attributes {dimension_semantics = [#tpu.dimension_semantics<arbitrary>], iteration_bounds = array<i64: 1>, scalar_prefetch = 0 : i64, scratch_operands = 1 : i64, tpu.core_type = #tpu.core_type<tc>, window_params = [{transform_indices = @transform_0, window_bounds = array<i64: 24, 128>}, {transform_indices = @transform_1, window_bounds = array<i64: 128, 512>}, {pipeline_mode = #tpu.pipeline_mode<synchronous>, transform_indices = @transform_2, window_bounds = array<i64: 1, 512>}, {pipeline_mode = #tpu.pipeline_mode<synchronous>, transform_indices = @transform_3, window_bounds = array<i64: 64, 256>}, {pipeline_mode = #tpu.pipeline_mode<synchronous>, transform_indices = @transform_4, window_bounds = array<i64: 64, 256>}, {pipeline_mode = #tpu.pipeline_mode<synchronous>, transform_indices = @transform_5, window_bounds = array<i64: 3, 8, 128>}]} {
    %c0_i32 = arith.constant 0 : i32
    %0 = arith.cmpi eq, %arg0, %c0_i32 : i32
    %1 = arith.extui %0 : i1 to i32
    %c0_i32_0 = arith.constant 0 : i32
    %2 = arith.cmpi ne, %1, %c0_i32_0 : i32
    scf.if %2 {
      %c0_10 = arith.constant 0 : index
      %c0_11 = arith.constant 0 : index
      %12 = vector.load %arg3[%c0_10, %c0_11] : memref<1x512xf32, #tpu.memory_space<vmem>>, vector<1x512xf32>
      %13 = vector.shape_cast %12 : vector<1x512xf32> to vector<1x512xf32>
      %14 = vector.broadcast %13 : vector<1x512xf32> to vector<24x512xf32>
      %c0_12 = arith.constant 0 : index
      %c0_13 = arith.constant 0 : index
      %15 = vector.load %arg7[%c0_12, %c0_13] : memref<24x512xf32, #tpu.memory_space<vmem>>, vector<24x512xf32>
      tpu.vector_store %arg7[%c0_12, %c0_13], %14 {strides = array<i32>} : memref<24x512xf32, #tpu.memory_space<vmem>>, vector<24x512xf32>,
    } else {
    }
    %c0 = arith.constant 0 : index
    %c0_1 = arith.constant 0 : index
    %3 = vector.load %arg7[%c0, %c0_1] : memref<24x512xf32, #tpu.memory_space<vmem>>, vector<24x512xf32>
    %c0_2 = arith.constant 0 : index
    %c0_3 = arith.constant 0 : index
    %4 = vector.load %arg1[%c0_2, %c0_3] : memref<24x128xbf16, #tpu.memory_space<vmem>>, vector<24x128xbf16>
    %c0_4 = arith.constant 0 : index
    %c0_5 = arith.constant 0 : index
    %5 = vector.load %arg2[%c0_4, %c0_5] : memref<128x512xbf16, #tpu.memory_space<vmem>>, vector<128x512xbf16>
    %cst = arith.constant dense<0.000000e+00> : vector<24x512xf32>
    %6 = tpu.matmul %4, %5, %cst {dimension_numbers = #tpu.dot_dimension_numbers<[1], [0], [0], [1], [0, 0, 1, 1], [], []>} : vector<24x128xbf16>, vector<128x512xbf16>, vector<24x512xf32> -> vector<24x512xf32>
    %7 = arith.addf %3, %6 : vector<24x512xf32>
    %c0_6 = arith.constant 0 : index
    %c0_7 = arith.constant 0 : index
    %8 = vector.load %arg7[%c0_6, %c0_7] : memref<24x512xf32, #tpu.memory_space<vmem>>, vector<24x512xf32>
    tpu.vector_store %arg7[%c0_6, %c0_7], %7 {strides = array<i32>} : memref<24x512xf32, #tpu.memory_space<vmem>>, vector<24x512xf32>,
    %c0_i32_8 = arith.constant 0 : i32
    %9 = arith.cmpi eq, %arg0, %c0_i32_8 : i32
    %10 = arith.extui %9 : i1 to i32
    %c0_i32_9 = arith.constant 0 : i32
    %11 = arith.cmpi ne, %10, %c0_i32_9 : i32
    scf.if %11 {
      %c0_10 = arith.constant 0 : index
      %c0_11 = arith.constant 0 : index
      %12 = vector.load %arg4[%c0_10, %c0_11] : memref<64x256xbf16, #tpu.memory_space<vmem>>, vector<64x256xbf16>
      %c0_12 = arith.constant 0 : index
      %c0_13 = arith.constant 0 : index
      %13 = vector.load %arg5[%c0_12, %c0_13] : memref<64x256xbf16, #tpu.memory_space<vmem>>, vector<64x256xbf16>
      %cst_14 = arith.constant 0.000000e+00 : f32
      %14 = vector.broadcast %cst_14 : f32 to vector<8x64xf32>
      %c0_15 = arith.constant 0 : index
      %c0_16 = arith.constant 0 : index
      %15 = vector.load %arg7[%c0_15, %c0_16] : memref<24x512xf32, #tpu.memory_space<vmem>>, vector<8x256xf32>
      %c16 = arith.constant 16 : index
      %c256 = arith.constant 256 : index
      %16 = vector.load %arg7[%c16, %c256] : memref<24x512xf32, #tpu.memory_space<vmem>>, vector<8x256xf32>
      %17 = arith.truncf %14 : vector<8x64xf32> to vector<8x64xbf16>
      %cst_17 = arith.constant dense<0.000000e+00> : vector<8x256xf32>
      %18 = tpu.matmul %17, %12, %cst_17 {dimension_numbers = #tpu.dot_dimension_numbers<[1], [0], [0], [1], [0, 0, 1, 1], [], []>} : vector<8x64xbf16>, vector<64x256xbf16>, vector<8x256xf32> -> vector<8x256xf32>
      %19 = arith.addf %15, %18 : vector<8x256xf32>
      %20 = vector.extract_strided_slice %19 {offsets = [0, 0], sizes = [8, 64], strides = [1, 1]} : vector<8x256xf32> to vector<8x64xf32>
      %21 = arith.negf %20 : vector<8x64xf32>
      %22 = math.exp %21 : vector<8x64xf32>
      %cst_18 = arith.constant 1.000000e+00 : f32
      %23 = vector.broadcast %cst_18 : f32 to vector<8x64xf32>
      %24 = arith.addf %23, %22 : vector<8x64xf32>
      %25 = arith.divf %23, %24 : vector<8x64xf32>
      %26 = vector.extract_strided_slice %19 {offsets = [0, 64], sizes = [8, 64], strides = [1, 1]} : vector<8x256xf32> to vector<8x64xf32>
      %27 = arith.negf %26 : vector<8x64xf32>
      %28 = math.exp %27 : vector<8x64xf32>
      %cst_19 = arith.constant 1.000000e+00 : f32
      %29 = vector.broadcast %cst_19 : f32 to vector<8x64xf32>
      %30 = arith.addf %29, %28 : vector<8x64xf32>
      %31 = arith.divf %29, %30 : vector<8x64xf32>
      %32 = vector.extract_strided_slice %19 {offsets = [0, 128], sizes = [8, 64], strides = [1, 1]} : vector<8x256xf32> to vector<8x64xf32>
      %33 = math.tanh %32 : vector<8x64xf32>
      %34 = vector.extract_strided_slice %19 {offsets = [0, 192], sizes = [8, 64], strides = [1, 1]} : vector<8x256xf32> to vector<8x64xf32>
      %35 = arith.negf %34 : vector<8x64xf32>
      %36 = math.exp %35 : vector<8x64xf32>
      %cst_20 = arith.constant 1.000000e+00 : f32
      %37 = vector.broadcast %cst_20 : f32 to vector<8x64xf32>
      %38 = arith.addf %37, %36 : vector<8x64xf32>
      %39 = arith.divf %37, %38 : vector<8x64xf32>
      %40 = arith.mulf %31, %14 : vector<8x64xf32>
      %41 = arith.mulf %25, %33 : vector<8x64xf32>
      %42 = arith.addf %40, %41 : vector<8x64xf32>
      %43 = math.tanh %42 : vector<8x64xf32>
      %44 = arith.mulf %39, %43 : vector<8x64xf32>
      %45 = arith.truncf %14 : vector<8x64xf32> to vector<8x64xbf16>
      %cst_21 = arith.constant dense<0.000000e+00> : vector<8x256xf32>
      %46 = tpu.matmul %45, %13, %cst_21 {dimension_numbers = #tpu.dot_dimension_numbers<[1], [0], [0], [1], [0, 0, 1, 1], [], []>} : vector<8x64xbf16>, vector<64x256xbf16>, vector<8x256xf32> -> vector<8x256xf32>
      %47 = arith.addf %16, %46 : vector<8x256xf32>
      %48 = vector.extract_strided_slice %47 {offsets = [0, 0], sizes = [8, 64], strides = [1, 1]} : vector<8x256xf32> to vector<8x64xf32>
      %49 = arith.negf %48 : vector<8x64xf32>
      %50 = math.exp %49 : vector<8x64xf32>
      %cst_22 = arith.constant 1.000000e+00 : f32
      %51 = vector.broadcast %cst_22 : f32 to vector<8x64xf32>
      %52 = arith.addf %51, %50 : vector<8x64xf32>
      %53 = arith.divf %51, %52 : vector<8x64xf32>
      %54 = vector.extract_strided_slice %47 {offsets = [0, 64], sizes = [8, 64], strides = [1, 1]} : vector<8x256xf32> to vector<8x64xf32>
      %55 = arith.negf %54 : vector<8x64xf32>
      %56 = math.exp %55 : vector<8x64xf32>
      %cst_23 = arith.constant 1.000000e+00 : f32
      %57 = vector.broadcast %cst_23 : f32 to vector<8x64xf32>
      %58 = arith.addf %57, %56 : vector<8x64xf32>
      %59 = arith.divf %57, %58 : vector<8x64xf32>
      %60 = vector.extract_strided_slice %47 {offsets = [0, 128], sizes = [8, 64], strides = [1, 1]} : vector<8x256xf32> to vector<8x64xf32>
      %61 = math.tanh %60 : vector<8x64xf32>
      %62 = vector.extract_strided_slice %47 {offsets = [0, 192], sizes = [8, 64], strides = [1, 1]} : vector<8x256xf32> to vector<8x64xf32>
      %63 = arith.negf %62 : vector<8x64xf32>
      %64 = math.exp %63 : vector<8x64xf32>
      %cst_24 = arith.constant 1.000000e+00 : f32
      %65 = vector.broadcast %cst_24 : f32 to vector<8x64xf32>
      %66 = arith.addf %65, %64 : vector<8x64xf32>
      %67 = arith.divf %65, %66 : vector<8x64xf32>
      %68 = arith.mulf %59, %14 : vector<8x64xf32>
      %69 = arith.mulf %53, %61 : vector<8x64xf32>
      %70 = arith.addf %68, %69 : vector<8x64xf32>
      %71 = math.tanh %70 : vector<8x64xf32>
      %72 = arith.mulf %67, %71 : vector<8x64xf32>
      %c0_25 = arith.constant 0 : index
      %c0_26 = arith.constant 0 : index
      %c0_27 = arith.constant 0 : index
      %73 = vector.load %arg6[%c0_25, %c0_26, %c0_27] : memref<3x8x128xf32, #tpu.memory_space<vmem>>, vector<1x8x64xf32>
      %74 = vector.shape_cast %73 : vector<1x8x64xf32> to vector<8x64xf32>
      %75 = vector.shape_cast %44 : vector<8x64xf32> to vector<1x8x64xf32>
      tpu.vector_store %arg6[%c0_25, %c0_26, %c0_27], %75 {strides = array<i32>} : memref<3x8x128xf32, #tpu.memory_space<vmem>>, vector<1x8x64xf32>,
      %c2 = arith.constant 2 : index
      %c0_28 = arith.constant 0 : index
      %c64 = arith.constant 64 : index
      %76 = vector.load %arg6[%c2, %c0_28, %c64] : memref<3x8x128xf32, #tpu.memory_space<vmem>>, vector<1x8x64xf32>
      %77 = vector.shape_cast %76 : vector<1x8x64xf32> to vector<8x64xf32>
      %78 = vector.shape_cast %72 : vector<8x64xf32> to vector<1x8x64xf32>
      tpu.vector_store %arg6[%c2, %c0_28, %c64], %78 {strides = array<i32>} : memref<3x8x128xf32, #tpu.memory_space<vmem>>, vector<1x8x64xf32>,
      %c8 = arith.constant 8 : index
      %c0_29 = arith.constant 0 : index
      %79 = vector.load %arg7[%c8, %c0_29] : memref<24x512xf32, #tpu.memory_space<vmem>>, vector<8x256xf32>
      %c8_30 = arith.constant 8 : index
      %c256_31 = arith.constant 256 : index
      %80 = vector.load %arg7[%c8_30, %c256_31] : memref<24x512xf32, #tpu.memory_space<vmem>>, vector<8x256xf32>
      %81 = arith.truncf %44 : vector<8x64xf32> to vector<8x64xbf16>
      %cst_32 = arith.constant dense<0.000000e+00> : vector<8x256xf32>
      %82 = tpu.matmul %81, %12, %cst_32 {dimension_numbers = #tpu.dot_dimension_numbers<[1], [0], [0], [1], [0, 0, 1, 1], [], []>} : vector<8x64xbf16>, vector<64x256xbf16>, vector<8x256xf32> -> vector<8x256xf32>
      %83 = arith.addf %79, %82 : vector<8x256xf32>
      %84 = vector.extract_strided_slice %83 {offsets = [0, 0], sizes = [8, 64], strides = [1, 1]} : vector<8x256xf32> to vector<8x64xf32>
      %85 = arith.negf %84 : vector<8x64xf32>
      %86 = math.exp %85 : vector<8x64xf32>
      %cst_33 = arith.constant 1.000000e+00 : f32
      %87 = vector.broadcast %cst_33 : f32 to vector<8x64xf32>
      %88 = arith.addf %87, %86 : vector<8x64xf32>
      %89 = arith.divf %87, %88 : vector<8x64xf32>
      %90 = vector.extract_strided_slice %83 {offsets = [0, 64], sizes = [8, 64], strides = [1, 1]} : vector<8x256xf32> to vector<8x64xf32>
      %91 = arith.negf %90 : vector<8x64xf32>
      %92 = math.exp %91 : vector<8x64xf32>
      %cst_34 = arith.constant 1.000000e+00 : f32
      %93 = vector.broadcast %cst_34 : f32 to vector<8x64xf32>
      %94 = arith.addf %93, %92 : vector<8x64xf32>
      %95 = arith.divf %93, %94 : vector<8x64xf32>
      %96 = vector.extract_strided_slice %83 {offsets = [0, 128], sizes = [8, 64], strides = [1, 1]} : vector<8x256xf32> to vector<8x64xf32>
      %97 = math.tanh %96 : vector<8x64xf32>
      %98 = vector.extract_strided_slice %83 {offsets = [0, 192], sizes = [8, 64], strides = [1, 1]} : vector<8x256xf32> to vector<8x64xf32>
      %99 = arith.negf %98 : vector<8x64xf32>
      %100 = math.exp %99 : vector<8x64xf32>
      %cst_35 = arith.constant 1.000000e+00 : f32
      %101 = vector.broadcast %cst_35 : f32 to vector<8x64xf32>
      %102 = arith.addf %101, %100 : vector<8x64xf32>
      %103 = arith.divf %101, %102 : vector<8x64xf32>
      %104 = arith.mulf %95, %42 : vector<8x64xf32>
      %105 = arith.mulf %89, %97 : vector<8x64xf32>
      %106 = arith.addf %104, %105 : vector<8x64xf32>
      %107 = math.tanh %106 : vector<8x64xf32>
      %108 = arith.mulf %103, %107 : vector<8x64xf32>
      %109 = arith.truncf %72 : vector<8x64xf32> to vector<8x64xbf16>
      %cst_36 = arith.constant dense<0.000000e+00> : vector<8x256xf32>
      %110 = tpu.matmul %109, %13, %cst_36 {dimension_numbers = #tpu.dot_dimension_numbers<[1], [0], [0], [1], [0, 0, 1, 1], [], []>} : vector<8x64xbf16>, vector<64x256xbf16>, vector<8x256xf32> -> vector<8x256xf32>
      %111 = arith.addf %80, %110 : vector<8x256xf32>
      %112 = vector.extract_strided_slice %111 {offsets = [0, 0], sizes = [8, 64], strides = [1, 1]} : vector<8x256xf32> to vector<8x64xf32>
      %113 = arith.negf %112 : vector<8x64xf32>
      %114 = math.exp %113 : vector<8x64xf32>
      %cst_37 = arith.constant 1.000000e+00 : f32
      %115 = vector.broadcast %cst_37 : f32 to vector<8x64xf32>
      %116 = arith.addf %115, %114 : vector<8x64xf32>
      %117 = arith.divf %115, %116 : vector<8x64xf32>
      %118 = vector.extract_strided_slice %111 {offsets = [0, 64], sizes = [8, 64], strides = [1, 1]} : vector<8x256xf32> to vector<8x64xf32>
      %119 = arith.negf %118 : vector<8x64xf32>
      %120 = math.exp %119 : vector<8x64xf32>
      %cst_38 = arith.constant 1.000000e+00 : f32
      %121 = vector.broadcast %cst_38 : f32 to vector<8x64xf32>
      %122 = arith.addf %121, %120 : vector<8x64xf32>
      %123 = arith.divf %121, %122 : vector<8x64xf32>
      %124 = vector.extract_strided_slice %111 {offsets = [0, 128], sizes = [8, 64], strides = [1, 1]} : vector<8x256xf32> to vector<8x64xf32>
      %125 = math.tanh %124 : vector<8x64xf32>
      %126 = vector.extract_strided_slice %111 {offsets = [0, 192], sizes = [8, 64], strides = [1, 1]} : vector<8x256xf32> to vector<8x64xf32>
      %127 = arith.negf %126 : vector<8x64xf32>
      %128 = math.exp %127 : vector<8x64xf32>
      %cst_39 = arith.constant 1.000000e+00 : f32
      %129 = vector.broadcast %cst_39 : f32 to vector<8x64xf32>
      %130 = arith.addf %129, %128 : vector<8x64xf32>
      %131 = arith.divf %129, %130 : vector<8x64xf32>
      %132 = arith.mulf %123, %70 : vector<8x64xf32>
      %133 = arith.mulf %117, %125 : vector<8x64xf32>
      %134 = arith.addf %132, %133 : vector<8x64xf32>
      %135 = math.tanh %134 : vector<8x64xf32>
      %136 = arith.mulf %131, %135 : vector<8x64xf32>
      %c1 = arith.constant 1 : index
      %c0_40 = arith.constant 0 : index
      %c0_41 = arith.constant 0 : index
      %137 = vector.load %arg6[%c1, %c0_40, %c0_41] : memref<3x8x128xf32, #tpu.memory_space<vmem>>, vector<1x8x64xf32>
      %138 = vector.shape_cast %137 : vector<1x8x64xf32> to vector<8x64xf32>
      %139 = vector.shape_cast %108 : vector<8x64xf32> to vector<1x8x64xf32>
      tpu.vector_store %arg6[%c1, %c0_40, %c0_41], %139 {strides = array<i32>} : memref<3x8x128xf32, #tpu.memory_space<vmem>>, vector<1x8x64xf32>,
      %c1_42 = arith.constant 1 : index
      %c0_43 = arith.constant 0 : index
      %c64_44 = arith.constant 64 : index
      %140 = vector.load %arg6[%c1_42, %c0_43, %c64_44] : memref<3x8x128xf32, #tpu.memory_space<vmem>>, vector<1x8x64xf32>
      %141 = vector.shape_cast %140 : vector<1x8x64xf32> to vector<8x64xf32>
      %142 = vector.shape_cast %136 : vector<8x64xf32> to vector<1x8x64xf32>
      tpu.vector_store %arg6[%c1_42, %c0_43, %c64_44], %142 {strides = array<i32>} : memref<3x8x128xf32, #tpu.memory_space<vmem>>, vector<1x8x64xf32>,
      %c16_45 = arith.constant 16 : index
      %c0_46 = arith.constant 0 : index
      %143 = vector.load %arg7[%c16_45, %c0_46] : memref<24x512xf32, #tpu.memory_space<vmem>>, vector<8x256xf32>
      %c0_47 = arith.constant 0 : index
      %c256_48 = arith.constant 256 : index
      %144 = vector.load %arg7[%c0_47, %c256_48] : memref<24x512xf32, #tpu.memory_space<vmem>>, vector<8x256xf32>
      %145 = arith.truncf %108 : vector<8x64xf32> to vector<8x64xbf16>
      %cst_49 = arith.constant dense<0.000000e+00> : vector<8x256xf32>
      %146 = tpu.matmul %145, %12, %cst_49 {dimension_numbers = #tpu.dot_dimension_numbers<[1], [0], [0], [1], [0, 0, 1, 1], [], []>} : vector<8x64xbf16>, vector<64x256xbf16>, vector<8x256xf32> -> vector<8x256xf32>
      %147 = arith.addf %143, %146 : vector<8x256xf32>
      %148 = vector.extract_strided_slice %147 {offsets = [0, 0], sizes = [8, 64], strides = [1, 1]} : vector<8x256xf32> to vector<8x64xf32>
      %149 = arith.negf %148 : vector<8x64xf32>
      %150 = math.exp %149 : vector<8x64xf32>
      %cst_50 = arith.constant 1.000000e+00 : f32
      %151 = vector.broadcast %cst_50 : f32 to vector<8x64xf32>
      %152 = arith.addf %151, %150 : vector<8x64xf32>
      %153 = arith.divf %151, %152 : vector<8x64xf32>
      %154 = vector.extract_strided_slice %147 {offsets = [0, 64], sizes = [8, 64], strides = [1, 1]} : vector<8x256xf32> to vector<8x64xf32>
      %155 = arith.negf %154 : vector<8x64xf32>
      %156 = math.exp %155 : vector<8x64xf32>
      %cst_51 = arith.constant 1.000000e+00 : f32
      %157 = vector.broadcast %cst_51 : f32 to vector<8x64xf32>
      %158 = arith.addf %157, %156 : vector<8x64xf32>
      %159 = arith.divf %157, %158 : vector<8x64xf32>
      %160 = vector.extract_strided_slice %147 {offsets = [0, 128], sizes = [8, 64], strides = [1, 1]} : vector<8x256xf32> to vector<8x64xf32>
      %161 = math.tanh %160 : vector<8x64xf32>
      %162 = vector.extract_strided_slice %147 {offsets = [0, 192], sizes = [8, 64], strides = [1, 1]} : vector<8x256xf32> to vector<8x64xf32>
      %163 = arith.negf %162 : vector<8x64xf32>
      %164 = math.exp %163 : vector<8x64xf32>
      %cst_52 = arith.constant 1.000000e+00 : f32
      %165 = vector.broadcast %cst_52 : f32 to vector<8x64xf32>
      %166 = arith.addf %165, %164 : vector<8x64xf32>
      %167 = arith.divf %165, %166 : vector<8x64xf32>
      %168 = arith.mulf %159, %106 : vector<8x64xf32>
      %169 = arith.mulf %153, %161 : vector<8x64xf32>
      %170 = arith.addf %168, %169 : vector<8x64xf32>
      %171 = math.tanh %170 : vector<8x64xf32>
      %172 = arith.mulf %167, %171 : vector<8x64xf32>
      %173 = arith.truncf %136 : vector<8x64xf32> to vector<8x64xbf16>
      %cst_53 = arith.constant dense<0.000000e+00> : vector<8x256xf32>
      %174 = tpu.matmul %173, %13, %cst_53 {dimension_numbers = #tpu.dot_dimension_numbers<[1], [0], [0], [1], [0, 0, 1, 1], [], []>} : vector<8x64xbf16>, vector<64x256xbf16>, vector<8x256xf32> -> vector<8x256xf32>
      %175 = arith.addf %144, %174 : vector<8x256xf32>
      %176 = vector.extract_strided_slice %175 {offsets = [0, 0], sizes = [8, 64], strides = [1, 1]} : vector<8x256xf32> to vector<8x64xf32>
      %177 = arith.negf %176 : vector<8x64xf32>
      %178 = math.exp %177 : vector<8x64xf32>
      %cst_54 = arith.constant 1.000000e+00 : f32
      %179 = vector.broadcast %cst_54 : f32 to vector<8x64xf32>
      %180 = arith.addf %179, %178 : vector<8x64xf32>
      %181 = arith.divf %179, %180 : vector<8x64xf32>
      %182 = vector.extract_strided_slice %175 {offsets = [0, 64], sizes = [8, 64], strides = [1, 1]} : vector<8x256xf32> to vector<8x64xf32>
      %183 = arith.negf %182 : vector<8x64xf32>
      %184 = math.exp %183 : vector<8x64xf32>
      %cst_55 = arith.constant 1.000000e+00 : f32
      %185 = vector.broadcast %cst_55 : f32 to vector<8x64xf32>
      %186 = arith.addf %185, %184 : vector<8x64xf32>
      %187 = arith.divf %185, %186 : vector<8x64xf32>
      %188 = vector.extract_strided_slice %175 {offsets = [0, 128], sizes = [8, 64], strides = [1, 1]} : vector<8x256xf32> to vector<8x64xf32>
      %189 = math.tanh %188 : vector<8x64xf32>
      %190 = vector.extract_strided_slice %175 {offsets = [0, 192], sizes = [8, 64], strides = [1, 1]} : vector<8x256xf32> to vector<8x64xf32>
      %191 = arith.negf %190 : vector<8x64xf32>
      %192 = math.exp %191 : vector<8x64xf32>
      %cst_56 = arith.constant 1.000000e+00 : f32
      %193 = vector.broadcast %cst_56 : f32 to vector<8x64xf32>
      %194 = arith.addf %193, %192 : vector<8x64xf32>
      %195 = arith.divf %193, %194 : vector<8x64xf32>
      %196 = arith.mulf %187, %134 : vector<8x64xf32>
      %197 = arith.mulf %181, %189 : vector<8x64xf32>
      %198 = arith.addf %196, %197 : vector<8x64xf32>
      %199 = math.tanh %198 : vector<8x64xf32>
      %200 = arith.mulf %195, %199 : vector<8x64xf32>
      %c2_57 = arith.constant 2 : index
      %c0_58 = arith.constant 0 : index
      %c0_59 = arith.constant 0 : index
      %201 = vector.load %arg6[%c2_57, %c0_58, %c0_59] : memref<3x8x128xf32, #tpu.memory_space<vmem>>, vector<1x8x64xf32>
      %202 = vector.shape_cast %201 : vector<1x8x64xf32> to vector<8x64xf32>
      %203 = vector.shape_cast %172 : vector<8x64xf32> to vector<1x8x64xf32>
      tpu.vector_store %arg6[%c2_57, %c0_58, %c0_59], %203 {strides = array<i32>} : memref<3x8x128xf32, #tpu.memory_space<vmem>>, vector<1x8x64xf32>,
      %c0_60 = arith.constant 0 : index
      %c0_61 = arith.constant 0 : index
      %c64_62 = arith.constant 64 : index
      %204 = vector.load %arg6[%c0_60, %c0_61, %c64_62] : memref<3x8x128xf32, #tpu.memory_space<vmem>>, vector<1x8x64xf32>
      %205 = vector.shape_cast %204 : vector<1x8x64xf32> to vector<8x64xf32>
      %206 = vector.shape_cast %200 : vector<8x64xf32> to vector<1x8x64xf32>
      tpu.vector_store %arg6[%c0_60, %c0_61, %c64_62], %206 {strides = array<i32>} : memref<3x8x128xf32, #tpu.memory_space<vmem>>, vector<1x8x64xf32>,
    } else {
    }
    return
  }
  func.func @transform_0(%arg0: i32) -> (i32, i32) {
    %c0_i32 = arith.constant 0 : i32
    %c0_i32_0 = arith.constant 0 : i32
    return %c0_i32, %arg0 : i32, i32
  }
  func.func @transform_1(%arg0: i32) -> (i32, i32) {
    %c0_i32 = arith.constant 0 : i32
    %c0_i32_0 = arith.constant 0 : i32
    return %arg0, %c0_i32 : i32, i32
  }
  func.func @transform_2(%arg0: i32) -> (i32, i32) {
    %c0_i32 = arith.constant 0 : i32
    %c0_i32_0 = arith.constant 0 : i32
    %c0_i32_1 = arith.constant 0 : i32
    return %c0_i32, %c0_i32_0 : i32, i32
  }
  func.func @transform_3(%arg0: i32) -> (i32, i32) {
    %c0_i32 = arith.constant 0 : i32
    %c0_i32_0 = arith.constant 0 : i32
    %c0_i32_1 = arith.constant 0 : i32
    return %c0_i32, %c0_i32_0 : i32, i32
  }
  func.func @transform_4(%arg0: i32) -> (i32, i32) {
    %c0_i32 = arith.constant 0 : i32
    %c0_i32_0 = arith.constant 0 : i32
    %c0_i32_1 = arith.constant 0 : i32
    return %c0_i32, %c0_i32_0 : i32, i32
  }
  func.func @transform_5(%arg0: i32) -> (i32, i32, i32) {
    %c0_i32 = arith.constant 0 : i32
    %c0_i32_0 = arith.constant 0 : i32
    %c0_i32_1 = arith.constant 0 : i32
    %c0_i32_2 = arith.constant 0 : i32
    return %c0_i32, %c0_i32_0, %c0_i32_1 : i32, i32, i32
  }
}

</mosaic_0001>

<llo_original>
// kernel: lstm_block_forward.1
$region0: #{lstm_block_forward.1}
  #allocation0 [shape = 'u32[]', space=smem, size = 0x4, offset = 0x4, fixed_abs, tag = 'smem constant byte address 0x4 - core index']
  #allocation1 [shape = 'u32[144,128]{1,0:T(1,128)}', space=vmem, size = 0x12000, scoped, tag = 'internal scratch']
  #allocation2 [shape = 'f32[24,512]{1,0:T(8,128)}', space=vmem, size = 0xc000, scoped, tag = 'scratch operand']
  %s0 = inlined_call_operand.vmem [shape: bf16[24,128], index: 0, kind: input, shape index: {}]
  %s1 = inlined_call_operand.vmem [shape: bf16[128,512], index: 1, kind: input, shape index: {}]
  %s2 = inlined_call_operand.vmem [shape: f32[1,512], index: 2, kind: input, shape index: {}]
  %s3 = inlined_call_operand.vmem [shape: bf16[64,256], index: 3, kind: input, shape index: {}]
  %s4 = inlined_call_operand.vmem [shape: bf16[64,256], index: 4, kind: input, shape index: {}]
  %s5 = inlined_call_operand.hbm [shape: f32[3,8,128], index: 5, kind: output, shape index: {}]
  %s6 = sld [smem:[#allocation0]]
  $region38: #{lstm_block_forward.1} parent=0
    _
  %s8 = ssub.s32 1, %s6
  %s9 = scalar_select 0, %s8, %s6
  $region1: #{lstm_block_forward.1} parent=0
    #allocation3 [shape = 'u8[12288]{0}', space=vmem, size = 0x3000, scoped, tag = 'output window, operand 0, single buffered']
    #allocation4 [shape = 's32[1]{0}', space=sflag, size = 0x4, scoped, tag = 'scoped memory for lstm_block_forward.1']
    %10 = vsyncpa [#allocation4], 0
    // Predicated region
    $region2: #{lstm_block_forward.1} parent=1 // pred_check
      _
    $region3: #{lstm_block_forward.1} parent=1 // pred_check_branch
      %12 = sbr.rel (0) target = $region5
    $region4: #{lstm_block_forward.1} parent=1 // pred_region
      _
    $region5: #{lstm_block_forward.1} parent=1 // pred_fallthru
      _
    // Predicated region
    $region6: #{lstm_block_forward.1} parent=1 // pred_check
      _
    $region7: #{lstm_block_forward.1} parent=1 // pred_check_branch
      %14 = sbr.rel (0) target = $region9
    $region8: #{lstm_block_forward.1} parent=1 // pred_region
      _
    $region9: #{lstm_block_forward.1} parent=1 // pred_fallthru
      _
    // Predicated region
    $region10: #{lstm_block_forward.1} parent=1 // pred_check
      _
    $region11: #{lstm_block_forward.1} parent=1 // pred_check_branch
      %16 = sbr.rel (0) target = $region13
    $region12: #{lstm_block_forward.1} parent=1 // pred_region
      _
    $region13: #{lstm_block_forward.1} parent=1 // pred_fallthru
      _
    // Predicated region
    $region14: #{lstm_block_forward.1} parent=1 // pred_check
      _
    $region15: #{lstm_block_forward.1} parent=1 // pred_check_branch
      %18 = sbr.rel (0) target = $region17
    $region16: #{lstm_block_forward.1} parent=1 // pred_region
      _
    $region17: #{lstm_block_forward.1} parent=1 // pred_fallthru
      _
    // Predicated region
    $region18: #{lstm_block_forward.1} parent=1 // pred_check
      _
    $region19: #{lstm_block_forward.1} parent=1 // pred_check_branch
      %20 = sbr.rel (0) target = $region21
    $region20: #{lstm_block_forward.1} parent=1 // pred_region
      _
    $region21: #{lstm_block_forward.1} parent=1 // pred_fallthru
      _
    %p22 = scmp.eq.s32.totalorder 0, 0
    // Predicated region
    $region22: #{lstm_block_forward.1} parent=1 // pred_check
      %p23 = pneg %p22
    $region23: #{lstm_block_forward.1} parent=1 // pred_check_branch
      %25 = sbr.rel (%p23) target = $region25
    $region24: #{lstm_block_forward.1} parent=1 // pred_region
      %v26 = vld [vmem:[%s2] sm:$0xf]
      %v28 = vlaneseq
      %v29 = vshrl.u32 %v28, 7
      %v30 = vsub.s32 0, %v29
      %v31 = vrot.slane %v26, %v30
      %v32 = vlaneseq
      %v33 = vshrl.u32 %v32, 7
      %v34 = vsub.s32 1, %v33
      %v35 = vrot.slane %v26, %v34
      %v36 = vlaneseq
      %v37 = vshrl.u32 %v36, 7
      %v38 = vsub.s32 2, %v37
      %v39 = vrot.slane %v26, %v38
      %v40 = vlaneseq
      %v41 = vshrl.u32 %v40, 7
      %v42 = vsub.s32 3, %v41
      %v43 = vrot.slane %v26, %v42
      %48 = vst [vmem:[#allocation2] sm:$0xff] %v31
      %49 = vst [vmem:[#allocation2 + $0x8] sm:$0xff] %v35
      %50 = vst [vmem:[#allocation2 + $0x10] sm:$0xff] %v39
      %51 = vst [vmem:[#allocation2 + $0x18] sm:$0xff] %v43
      %52 = vst [vmem:[#allocation2 + $0x20] sm:$0xff] %v31
      %53 = vst [vmem:[#allocation2 + $0x28] sm:$0xff] %v35
      %54 = vst [vmem:[#allocation2 + $0x30] sm:$0xff] %v39
      %55 = vst [vmem:[#allocation2 + $0x38] sm:$0xff] %v43
      %56 = vst [vmem:[#allocation2 + $0x40] sm:$0xff] %v31
      %57 = vst [vmem:[#allocation2 + $0x48] sm:$0xff] %v35
      %58 = vst [vmem:[#allocation2 + $0x50] sm:$0xff] %v39
      %59 = vst [vmem:[#allocation2 + $0x58] sm:$0xff] %v43
    $region25: #{lstm_block_forward.1} parent=1 // pred_fallthru
      _
    %v60 = vld [vmem:[#allocation2] sm:$0xff]
    %v61 = vld [vmem:[#allocation2 + $0x8] sm:$0xff]
    %v62 = vld [vmem:[#allocation2 + $0x10] sm:$0xff]
    %v63 = vld [vmem:[#allocation2 + $0x18] sm:$0xff]
    %v64 = vld [vmem:[#allocation2 + $0x20] sm:$0xff]
    %v65 = vld [vmem:[#allocation2 + $0x28] sm:$0xff]
    %v66 = vld [vmem:[#allocation2 + $0x30] sm:$0xff]
    %v67 = vld [vmem:[#allocation2 + $0x38] sm:$0xff]
    %v68 = vld [vmem:[#allocation2 + $0x40] sm:$0xff]
    %v69 = vld [vmem:[#allocation2 + $0x48] sm:$0xff]
    %v70 = vld [vmem:[#allocation2 + $0x50] sm:$0xff]
    %v71 = vld [vmem:[#allocation2 + $0x58] sm:$0xff]
    %v72 = vld [vmem:[%s0] sm:$0xf]
    %v73 = vld [vmem:[%s0 + $0x4] sm:$0xf]
    %v74 = vld [vmem:[%s0 + $0x8] sm:$0xf]
    %v75 = vld [vmem:[%s1] sm:$0xff]
    %v76 = vld [vmem:[%s1 + $0x8] sm:$0xff]
    %v77 = vld [vmem:[%s1 + $0x10] sm:$0xff]
    %v78 = vld [vmem:[%s1 + $0x18] sm:$0xff]
    %v79 = vld [vmem:[%s1 + $0x20] sm:$0xff]
    %v80 = vld [vmem:[%s1 + $0x28] sm:$0xff]
    %v81 = vld [vmem:[%s1 + $0x30] sm:$0xff]
    %v82 = vld [vmem:[%s1 + $0x38] sm:$0xff]
    %v83 = vld [vmem:[%s1 + $0x40] sm:$0xff]
    %v84 = vld [vmem:[%s1 + $0x48] sm:$0xff]
    %v85 = vld [vmem:[%s1 + $0x50] sm:$0xff]
    %v86 = vld [vmem:[%s1 + $0x58] sm:$0xff]
    %v87 = vld [vmem:[%s1 + $0x60] sm:$0xff]
    %v88 = vld [vmem:[%s1 + $0x68] sm:$0xff]
    %v89 = vld [vmem:[%s1 + $0x70] sm:$0xff]
    %v90 = vld [vmem:[%s1 + $0x78] sm:$0xff]
    %v91 = vld [vmem:[%s1 + $0x80] sm:$0xff]
    %v92 = vld [vmem:[%s1 + $0x88] sm:$0xff]
    %v93 = vld [vmem:[%s1 + $0x90] sm:$0xff]
    %v94 = vld [vmem:[%s1 + $0x98] sm:$0xff]
    %v95 = vld [vmem:[%s1 + $0xa0] sm:$0xff]
    %v96 = vld [vmem:[%s1 + $0xa8] sm:$0xff]
    %v97 = vld [vmem:[%s1 + $0xb0] sm:$0xff]
    %v98 = vld [vmem:[%s1 + $0xb8] sm:$0xff]
    %v99 = vld [vmem:[%s1 + $0xc0] sm:$0xff]
    %v100 = vld [vmem:[%s1 + $0xc8] sm:$0xff]
    %v101 = vld [vmem:[%s1 + $0xd0] sm:$0xff]
    %v102 = vld [vmem:[%s1 + $0xd8] sm:$0xff]
    %v103 = vld [vmem:[%s1 + $0xe0] sm:$0xff]
    %v104 = vld [vmem:[%s1 + $0xe8] sm:$0xff]
    %v105 = vld [vmem:[%s1 + $0xf0] sm:$0xff]
    %v106 = vld [vmem:[%s1 + $0xf8] sm:$0xff]
    %v110 = vunpack.c.l.b16 %v72
    %v111 = vunpack.c.l.b16 %v73
    %v112 = vunpack.c.l.b16 %v74
    %v113 = vpack.c.b16 %v111, %v110
    %v114 = vpack.c.b16 %v112, %v112
    %v149 = vunpack.c.l.b16 %v75
    %v150 = vunpack.c.h.b16 %v75
    %v151 = vunpack.c.l.b16 %v76
    %v152 = vunpack.c.h.b16 %v76
    %v153 = vunpack.c.l.b16 %v77
    %v154 = vunpack.c.h.b16 %v77
    %v155 = vunpack.c.l.b16 %v78
    %v156 = vunpack.c.h.b16 %v78
    %v157 = vunpack.c.l.b16 %v79
    %v158 = vunpack.c.h.b16 %v79
    %v159 = vunpack.c.l.b16 %v80
    %v160 = vunpack.c.h.b16 %v80
    %v161 = vunpack.c.l.b16 %v81
    %v162 = vunpack.c.h.b16 %v81
    %v163 = vunpack.c.l.b16 %v82
    %v164 = vunpack.c.h.b16 %v82
    %v165 = vunpack.c.l.b16 %v83
    %v166 = vunpack.c.h.b16 %v83
    %v167 = vunpack.c.l.b16 %v84
    %v168 = vunpack.c.h.b16 %v84
    %v169 = vunpack.c.l.b16 %v85
    %v170 = vunpack.c.h.b16 %v85
    %v171 = vunpack.c.l.b16 %v86
    %v172 = vunpack.c.h.b16 %v86
    %v173 = vunpack.c.l.b16 %v87
    %v174 = vunpack.c.h.b16 %v87
    %v175 = vunpack.c.l.b16 %v88
    %v176 = vunpack.c.h.b16 %v88
    %v177 = vunpack.c.l.b16 %v89
    %v178 = vunpack.c.h.b16 %v89
    %v179 = vunpack.c.l.b16 %v90
    %v180 = vunpack.c.h.b16 %v90
    %v181 = vunpack.c.l.b16 %v91
    %v182 = vunpack.c.h.b16 %v91
    %v183 = vunpack.c.l.b16 %v92
    %v184 = vunpack.c.h.b16 %v92
    %v185 = vunpack.c.l.b16 %v93
    %v186 = vunpack.c.h.b16 %v93
    %v187 = vunpack.c.l.b16 %v94
    %v188 = vunpack.c.h.b16 %v94
    %v189 = vunpack.c.l.b16 %v95
    %v190 = vunpack.c.h.b16 %v95
    %v191 = vunpack.c.l.b16 %v96
    %v192 = vunpack.c.h.b16 %v96
    %v193 = vunpack.c.l.b16 %v97
    %v194 = vunpack.c.h.b16 %v97
    %v195 = vunpack.c.l.b16 %v98
    %v196 = vunpack.c.h.b16 %v98
    %v197 = vunpack.c.l.b16 %v99
    %v198 = vunpack.c.h.b16 %v99
    %v199 = vunpack.c.l.b16 %v100
    %v200 = vunpack.c.h.b16 %v100
    %v201 = vunpack.c.l.b16 %v101
    %v202 = vunpack.c.h.b16 %v101
    %v203 = vunpack.c.l.b16 %v102
    %v204 = vunpack.c.h.b16 %v102
    %v205 = vunpack.c.l.b16 %v103
    %v206 = vunpack.c.h.b16 %v103
    %v207 = vunpack.c.l.b16 %v104
    %v208 = vunpack.c.h.b16 %v104
    %v209 = vunpack.c.l.b16 %v105
    %v210 = vunpack.c.h.b16 %v105
    %v211 = vunpack.c.l.b16 %v106
    %v212 = vunpack.c.h.b16 %v106
    %v213 = vpack.c.b16 %v153, %v149
    %v214 = vpack.c.b16 %v154, %v150
    %v215 = vpack.c.b16 %v155, %v151
    %v216 = vpack.c.b16 %v156, %v152
    %v217 = vpack.c.b16 %v161, %v157
    %v218 = vpack.c.b16 %v162, %v158
    %v219 = vpack.c.b16 %v163, %v159
    %v220 = vpack.c.b16 %v164, %v160
    %v221 = vpack.c.b16 %v169, %v165
    %v222 = vpack.c.b16 %v170, %v166
    %v223 = vpack.c.b16 %v171, %v167
    %v224 = vpack.c.b16 %v172, %v168
    %v225 = vpack.c.b16 %v177, %v173
    %v226 = vpack.c.b16 %v178, %v174
    %v227 = vpack.c.b16 %v179, %v175
    %v228 = vpack.c.b16 %v180, %v176
    %v229 = vpack.c.b16 %v185, %v181
    %v230 = vpack.c.b16 %v186, %v182
    %v231 = vpack.c.b16 %v187, %v183
    %v232 = vpack.c.b16 %v188, %v184
    %v233 = vpack.c.b16 %v193, %v189
    %v234 = vpack.c.b16 %v194, %v190
    %v235 = vpack.c.b16 %v195, %v191
    %v236 = vpack.c.b16 %v196, %v192
    %v237 = vpack.c.b16 %v201, %v197
    %v238 = vpack.c.b16 %v202, %v198
    %v239 = vpack.c.b16 %v203, %v199
    %v240 = vpack.c.b16 %v204, %v200
    %v241 = vpack.c.b16 %v209, %v205
    %v242 = vpack.c.b16 %v210, %v206
    %v243 = vpack.c.b16 %v211, %v207
    %v244 = vpack.c.b16 %v212, %v208
    %277 = vmatprep.subr.bf16.mxu0 %v242
    %278 = vmatpush1.bf16.msra.mxu0 %v241
    %279 = vmatprep.subr.bf16.mxu0 %v238
    %280 = vmatpush1.bf16.msra.mxu0 %v237
    %281 = vmatprep.subr.bf16.mxu0 %v234
    %282 = vmatpush1.bf16.msra.mxu0 %v233
    %283 = vmatprep.subr.bf16.mxu0 %v230
    %284 = vmatpush1.bf16.msra.mxu0 %v229
    %285 = vmatprep.subr.bf16.mxu0 %v226
    %286 = vmatpush1.bf16.msra.mxu0 %v225
    %287 = vmatprep.subr.bf16.mxu0 %v222
    %288 = vmatpush1.bf16.msra.mxu0 %v221
    %289 = vmatprep.subr.bf16.mxu0 %v218
    %290 = vmatpush1.bf16.msra.mxu0 %v217
    %291 = vmatprep.subr.bf16.mxu0 %v214
    %292 = vmatpush1.bf16.msra.mxu0 %v213
    %293 = vmatprep.subr.bf16.mxu0 0
    %294 = vmatpush2.bf16.msra.mxu0 0
    %295 = vmatprep.subr.bf16.mxu0 0
    %296 = vmatpush2.bf16.msra.mxu0 0
    %297 = vmatprep.subr.bf16.mxu0 0
    %298 = vmatpush2.bf16.msra.mxu0 0
    %299 = vmatprep.subr.bf16.mxu0 0
    %300 = vmatpush2.bf16.msra.mxu0 0
    %301 = vmatprep.subr.bf16.mxu0 0
    %302 = vmatpush2.bf16.msra.mxu0 0
    %303 = vmatprep.subr.bf16.mxu0 0
    %304 = vmatpush2.bf16.msra.mxu0 0
    %305 = vmatprep.subr.bf16.mxu0 0
    %306 = vmatpush2.bf16.msra.mxu0 0
    %307 = vmatprep.subr.bf16.mxu0 0
    %308 = vmatpush2.bf16.msra.mxu0 0
    %309 = vmatprep.mubr.bf16.mxu0 0
    %310 = vmatmul.mubr.bf16.gmra.mxu0 %v113
    %v311 = vpop.f32.mrf.mxu0
    %v312 = vadd.f32 0.0, %v311
    %v313 = vpop.f32.mrf.mxu0
    %v314 = vadd.f32 0.0, %v313
    %v315 = vpop.f32.mrf.mxu0
    %v316 = vadd.f32 0.0, %v315
    %v317 = vpop.f32.mrf.mxu0
    %v318 = vadd.f32 0.0, %v317
    %319 = vmatprep.mubr.bf16.mxu0 0
    %320 = vmatmul.mubr.bf16.gmra.mxu0 %v114
    %v321 = vpop.f32.mrf.mxu0
    %v322 = vadd.f32 0.0, %v321
    %v323 = vpop.f32.mrf.mxu0
    %v324 = vadd.f32 0.0, %v323
    %v325 = vpop.f32.mrf.mxu0
    %v326 = vpop.f32.mrf.mxu0
    %327 = vdwg.mxu0
    %328 = vmatprep.subr.bf16.mxu0 %v244
    %329 = vmatpush1.bf16.msra.mxu0 %v243
    %330 = vmatprep.subr.bf16.mxu0 %v240
    %331 = vmatpush1.bf16.msra.mxu0 %v239
    %332 = vmatprep.subr.bf16.mxu0 %v236
    %333 = vmatpush1.bf16.msra.mxu0 %v235
    %334 = vmatprep.subr.bf16.mxu0 %v232
    %335 = vmatpush1.bf16.msra.mxu0 %v231
    %336 = vmatprep.subr.bf16.mxu0 %v228
    %337 = vmatpush1.bf16.msra.mxu0 %v227
    %338 = vmatprep.subr.bf16.mxu0 %v224
    %339 = vmatpush1.bf16.msra.mxu0 %v223
    %340 = vmatprep.subr.bf16.mxu0 %v220
    %341 = vmatpush1.bf16.msra.mxu0 %v219
    %342 = vmatprep.subr.bf16.mxu0 %v216
    %343 = vmatpush1.bf16.msra.mxu0 %v215
    %344 = vmatprep.subr.bf16.mxu0 0
    %345 = vmatpush2.bf16.msra.mxu0 0
    %346 = vmatprep.subr.bf16.mxu0 0
    %347 = vmatpush2.bf16.msra.mxu0 0
    %348 = vmatprep.subr.bf16.mxu0 0
    %349 = vmatpush2.bf16.msra.mxu0 0
    %350 = vmatprep.subr.bf16.mxu0 0
    %351 = vmatpush2.bf16.msra.mxu0 0
    %352 = vmatprep.subr.bf16.mxu0 0
    %353 = vmatpush2.bf16.msra.mxu0 0
    %354 = vmatprep.subr.bf16.mxu0 0
    %355 = vmatpush2.bf16.msra.mxu0 0
    %356 = vmatprep.subr.bf16.mxu0 0
    %357 = vmatpush2.bf16.msra.mxu0 0
    %358 = vmatprep.subr.bf16.mxu0 0
    %359 = vmatpush2.bf16.msra.mxu0 0
    %360 = vmatprep.mubr.bf16.mxu0 0
    %361 = vmatmul.mubr.bf16.gmra.mxu0 %v113
    %v362 = vpop.f32.mrf.mxu0
    %v363 = vadd.f32 0.0, %v362
    %v364 = vpop.f32.mrf.mxu0
    %v365 = vadd.f32 0.0, %v364
    %v366 = vpop.f32.mrf.mxu0
    %v367 = vadd.f32 0.0, %v366
    %v368 = vpop.f32.mrf.mxu0
    %v369 = vadd.f32 0.0, %v368
    %370 = vmatprep.mubr.bf16.mxu0 0
    %371 = vmatmul.mubr.bf16.gmra.mxu0 %v114
    %v372 = vpop.f32.mrf.mxu0
    %v373 = vadd.f32 0.0, %v372
    %v374 = vpop.f32.mrf.mxu0
    %v375 = vadd.f32 0.0, %v374
    %v376 = vpop.f32.mrf.mxu0
    %v377 = vpop.f32.mrf.mxu0
    %378 = vdwg.mxu0
    %v379 = vadd.f32 %v60, %v312
    %v380 = vadd.f32 %v61, %v314
    %v381 = vadd.f32 %v62, %v363
    %v382 = vadd.f32 %v63, %v365
    %v383 = vadd.f32 %v64, %v316
    %v384 = vadd.f32 %v65, %v318
    %v385 = vadd.f32 %v66, %v367
    %v386 = vadd.f32 %v67, %v369
    %v387 = vadd.f32 %v68, %v322
    %v388 = vadd.f32 %v69, %v324
    %v389 = vadd.f32 %v70, %v373
    %v390 = vadd.f32 %v71, %v375
    %391 = vst [vmem:[#allocation2] sm:$0xff] %v379
    %392 = vst [vmem:[#allocation2 + $0x8] sm:$0xff] %v380
    %393 = vst [vmem:[#allocation2 + $0x10] sm:$0xff] %v381
    %394 = vst [vmem:[#allocation2 + $0x18] sm:$0xff] %v382
    %395 = vst [vmem:[#allocation2 + $0x20] sm:$0xff] %v383
    %396 = vst [vmem:[#allocation2 + $0x28] sm:$0xff] %v384
    %397 = vst [vmem:[#allocation2 + $0x30] sm:$0xff] %v385
    %398 = vst [vmem:[#allocation2 + $0x38] sm:$0xff] %v386
    %399 = vst [vmem:[#allocation2 + $0x40] sm:$0xff] %v387
    %400 = vst [vmem:[#allocation2 + $0x48] sm:$0xff] %v388
    %401 = vst [vmem:[#allocation2 + $0x50] sm:$0xff] %v389
    %402 = vst [vmem:[#allocation2 + $0x58] sm:$0xff] %v390
    // Predicated region
    $region26: #{lstm_block_forward.1} parent=1 // pred_check
      %p403 = pneg %p22
    $region27: #{lstm_block_forward.1} parent=1 // pred_check_branch
      %405 = sbr.rel (%p403) target = $region29
    $region28: #{lstm_block_forward.1} parent=1 // pred_region
      %v406 = vld [vmem:[%s3] sm:$0xff]
      %v407 = vld [vmem:[%s3 + $0x8] sm:$0xff]
      %v408 = vld [vmem:[%s3 + $0x10] sm:$0xff]
      %v409 = vld [vmem:[%s3 + $0x18] sm:$0xff]
      %v410 = vld [vmem:[%s3 + $0x20] sm:$0xff]
      %v411 = vld [vmem:[%s3 + $0x28] sm:$0xff]
      %v412 = vld [vmem:[%s3 + $0x30] sm:$0xff]
      %v413 = vld [vmem:[%s3 + $0x38] sm:$0xff]
      %v414 = vld [vmem:[%s4] sm:$0xff]
      %v415 = vld [vmem:[%s4 + $0x8] sm:$0xff]
      %v416 = vld [vmem:[%s4 + $0x10] sm:$0xff]
      %v417 = vld [vmem:[%s4 + $0x18] sm:$0xff]
      %v418 = vld [vmem:[%s4 + $0x20] sm:$0xff]
      %v419 = vld [vmem:[%s4 + $0x28] sm:$0xff]
      %v420 = vld [vmem:[%s4 + $0x30] sm:$0xff]
      %v421 = vld [vmem:[%s4 + $0x38] sm:$0xff]
      %v422 = vld [vmem:[#allocation2] sm:$0xff]
      %v423 = vld [vmem:[#allocation2 + $0x8] sm:$0xff]
      %v424 = vld [vmem:[#allocation2 + $0x50] sm:$0xff]
      %v425 = vld [vmem:[#allocation2 + $0x58] sm:$0xff]
      %v434 = vunpack.c.l.b16 %v406
      %v435 = vunpack.c.h.b16 %v406
      %v436 = vunpack.c.l.b16 %v407
      %v437 = vunpack.c.h.b16 %v407
      %v438 = vunpack.c.l.b16 %v408
      %v439 = vunpack.c.h.b16 %v408
      %v440 = vunpack.c.l.b16 %v409
      %v441 = vunpack.c.h.b16 %v409
      %v442 = vunpack.c.l.b16 %v410
      %v443 = vunpack.c.h.b16 %v410
      %v444 = vunpack.c.l.b16 %v411
      %v445 = vunpack.c.h.b16 %v411
      %v446 = vunpack.c.l.b16 %v412
      %v447 = vunpack.c.h.b16 %v412
      %v448 = vunpack.c.l.b16 %v413
      %v449 = vunpack.c.h.b16 %v413
      %v450 = vpack.c.b16 %v436, %v434
      %v451 = vpack.c.b16 %v437, %v435
      %v452 = vpack.c.b16 %v440, %v438
      %v453 = vpack.c.b16 %v441, %v439
      %v454 = vpack.c.b16 %v444, %v442
      %v455 = vpack.c.b16 %v445, %v443
      %v456 = vpack.c.b16 %v448, %v446
      %v457 = vpack.c.b16 %v449, %v447
      %vm466 = vcmask 523264
      %v468 = vsel %vm466, 0, 0
      %470 = vmatprep.subr.bf16.mxu0 0
      %471 = vmatpush1.bf16.msra.mxu0 0
      %472 = vmatprep.subr.bf16.mxu0 0
      %473 = vmatpush1.bf16.msra.mxu0 0
      %474 = vmatprep.subr.bf16.mxu0 0
      %475 = vmatpush1.bf16.msra.mxu0 0
      %476 = vmatprep.subr.bf16.mxu0 0
      %477 = vmatpush1.bf16.msra.mxu0 0
      %478 = vmatprep.subr.bf16.mxu0 %v457
      %479 = vmatpush1.bf16.msra.mxu0 %v456
      %480 = vmatprep.subr.bf16.mxu0 %v455
      %481 = vmatpush1.bf16.msra.mxu0 %v454
      %482 = vmatprep.subr.bf16.mxu0 %v453
      %483 = vmatpush1.bf16.msra.mxu0 %v452
      %484 = vmatprep.subr.bf16.mxu0 %v451
      %485 = vmatpush1.bf16.msra.mxu0 %v450
      %486 = vmatprep.subr.bf16.mxu0 0
      %487 = vmatpush2.bf16.msra.mxu0 0
      %488 = vmatprep.subr.bf16.mxu0 0
      %489 = vmatpush2.bf16.msra.mxu0 0
      %490 = vmatprep.subr.bf16.mxu0 0
      %491 = vmatpush2.bf16.msra.mxu0 0
      %492 = vmatprep.subr.bf16.mxu0 0
      %493 = vmatpush2.bf16.msra.mxu0 0
      %494 = vmatprep.subr.bf16.mxu0 0
      %495 = vmatpush2.bf16.msra.mxu0 0
      %496 = vmatprep.subr.bf16.mxu0 0
      %497 = vmatpush2.bf16.msra.mxu0 0
      %498 = vmatprep.subr.bf16.mxu0 0
      %499 = vmatpush2.bf16.msra.mxu0 0
      %500 = vmatprep.subr.bf16.mxu0 0
      %501 = vmatpush2.bf16.msra.mxu0 0
      %502 = vmatprep.mubr.bf16.mxu0 0
      %503 = vmatmul.mubr.bf16.gmra.mxu0 %v468
      %v504 = vpop.f32.mrf.mxu0
      %v505 = vadd.f32 0.0, %v504
      %v506 = vpop.f32.mrf.mxu0
      %v507 = vadd.f32 0.0, %v506
      %v508 = vpop.f32.mrf.mxu0
      %v509 = vpop.f32.mrf.mxu0
      %510 = vdwg.mxu0
      %v511 = vadd.f32 %v422, %v505
      %v512 = vadd.f32 %v423, %v507
      %v513 = vxor.u32 %v511, 2147483648
      %v514 = vmul.f32 %v513, 1.442695
      %v515 = vpow.pop %v514
      %v516 = vadd.f32 %v515, 1.0
      %v517 = vrcp.pop %v516
      %v518 = vmul.f32 1.0, %v517
      %v519 = vtanh.pop %v512
      %v520 = vxor.u32 %v512, 2147483648
      %v521 = vmul.f32 %v520, 1.442695
      %v522 = vpow.pop %v521
      %v523 = vadd.f32 %v522, 1.0
      %v524 = vrcp.pop %v523
      %v525 = vmul.f32 1.0, %v524
      %v526 = vmul.f32 %v518, 0.0
      %v527 = vmul.f32 %v518, %v519
      %529 = vrot.lane.b32.xlu0 %v527, 64
      %v530 = vpop.permute.xlu0 %529
      %v532 = vadd.f32 %v526, %v530
      %v533 = vtanh.pop %v532
      %v534 = vmul.f32 %v525, %v533
      %v543 = vunpack.c.l.b16 %v414
      %v544 = vunpack.c.h.b16 %v414
      %v545 = vunpack.c.l.b16 %v415
      %v546 = vunpack.c.h.b16 %v415
      %v547 = vunpack.c.l.b16 %v416
      %v548 = vunpack.c.h.b16 %v416
      %v549 = vunpack.c.l.b16 %v417
      %v550 = vunpack.c.h.b16 %v417
      %v551 = vunpack.c.l.b16 %v418
      %v552 = vunpack.c.h.b16 %v418
      %v553 = vunpack.c.l.b16 %v419
      %v554 = vunpack.c.h.b16 %v419
      %v555 = vunpack.c.l.b16 %v420
      %v556 = vunpack.c.h.b16 %v420
      %v557 = vunpack.c.l.b16 %v421
      %v558 = vunpack.c.h.b16 %v421
      %v559 = vpack.c.b16 %v545, %v543
      %v560 = vpack.c.b16 %v546, %v544
      %v561 = vpack.c.b16 %v549, %v547
      %v562 = vpack.c.b16 %v550, %v548
      %v563 = vpack.c.b16 %v553, %v551
      %v564 = vpack.c.b16 %v554, %v552
      %v565 = vpack.c.b16 %v557, %v555
      %v566 = vpack.c.b16 %v558, %v556
      %575 = vmatprep.subr.bf16.mxu0 0
      %576 = vmatpush1.bf16.msra.mxu0 0
      %577 = vmatprep.subr.bf16.mxu0 0
      %578 = vmatpush1.bf16.msra.mxu0 0
      %579 = vmatprep.subr.bf16.mxu0 0
      %580 = vmatpush1.bf16.msra.mxu0 0
      %581 = vmatprep.subr.bf16.mxu0 0
      %582 = vmatpush1.bf16.msra.mxu0 0
      %583 = vmatprep.subr.bf16.mxu0 %v566
      %584 = vmatpush1.bf16.msra.mxu0 %v565
      %585 = vmatprep.subr.bf16.mxu0 %v564
      %586 = vmatpush1.bf16.msra.mxu0 %v563
      %587 = vmatprep.subr.bf16.mxu0 %v562
      %588 = vmatpush1.bf16.msra.mxu0 %v561
      %589 = vmatprep.subr.bf16.mxu0 %v560
      %590 = vmatpush1.bf16.msra.mxu0 %v559
      %591 = vmatprep.subr.bf16.mxu0 0
      %592 = vmatpush2.bf16.msra.mxu0 0
      %593 = vmatprep.subr.bf16.mxu0 0
      %594 = vmatpush2.bf16.msra.mxu0 0
      %595 = vmatprep.subr.bf16.mxu0 0
      %596 = vmatpush2.bf16.msra.mxu0 0
      %597 = vmatprep.subr.bf16.mxu0 0
      %598 = vmatpush2.bf16.msra.mxu0 0
      %599 = vmatprep.subr.bf16.mxu0 0
      %600 = vmatpush2.bf16.msra.mxu0 0
      %601 = vmatprep.subr.bf16.mxu0 0
      %602 = vmatpush2.bf16.msra.mxu0 0
      %603 = vmatprep.subr.bf16.mxu0 0
      %604 = vmatpush2.bf16.msra.mxu0 0
      %605 = vmatprep.subr.bf16.mxu0 0
      %606 = vmatpush2.bf16.msra.mxu0 0
      %607 = vmatprep.mubr.bf16.mxu0 0
      %608 = vmatmul.mubr.bf16.gmra.mxu0 %v468
      %v609 = vpop.f32.mrf.mxu0
      %v610 = vadd.f32 0.0, %v609
      %v611 = vpop.f32.mrf.mxu0
      %v612 = vadd.f32 0.0, %v611
      %v613 = vpop.f32.mrf.mxu0
      %v614 = vpop.f32.mrf.mxu0
      %615 = vdwg.mxu0
      %v616 = vadd.f32 %v424, %v610
      %v617 = vadd.f32 %v425, %v612
      %v618 = vxor.u32 %v616, 2147483648
      %v619 = vmul.f32 %v618, 1.442695
      %v620 = vpow.pop %v619
      %v621 = vadd.f32 %v620, 1.0
      %v622 = vrcp.pop %v621
      %v623 = vmul.f32 1.0, %v622
      %v624 = vtanh.pop %v617
      %v625 = vxor.u32 %v617, 2147483648
      %v626 = vmul.f32 %v625, 1.442695
      %v627 = vpow.pop %v626
      %v628 = vadd.f32 %v627, 1.0
      %v629 = vrcp.pop %v628
      %v630 = vmul.f32 1.0, %v629
      %v631 = vmul.f32 %v623, 0.0
      %v632 = vmul.f32 %v623, %v624
      %634 = vrot.lane.b32.xlu0 %v632, 64
      %v635 = vpop.permute.xlu0 %634
      %v637 = vadd.f32 %v631, %v635
      %v638 = vtanh.pop %v637
      %v639 = vmul.f32 %v630, %v638
      %641 = vrot.lane.b32.xlu0 %v534, 64
      %v642 = vpop.permute.xlu0 %641
      %644 = vst.msk [vmem:[#allocation3] sm:$0xff] %vm466, %v642
      %s645 = scalar_lea.vmem [#allocation3], 16
      %vm646 = vcmask 1048064
      %647 = vst.msk [vmem:[%s645] sm:$0xff] %vm646, %v639
      %v648 = vld [vmem:[#allocation2 + $0x20] sm:$0xff]
      %v649 = vld [vmem:[#allocation2 + $0x28] sm:$0xff]
      %v650 = vld [vmem:[#allocation2 + $0x30] sm:$0xff]
      %v651 = vld [vmem:[#allocation2 + $0x38] sm:$0xff]
      %v652 = vpack.c.bf16 %v534, %v534
      %654 = vrot.lane.b32.xlu0 %v652, 64
      %v655 = vpop.permute.xlu0 %654
      %v657 = vsel %vm466, %v655, 0
      %659 = vmatprep.subr.bf16.mxu0 0
      %660 = vmatpush1.bf16.msra.mxu0 0
      %661 = vmatprep.subr.bf16.mxu0 0
      %662 = vmatpush1.bf16.msra.mxu0 0
      %663 = vmatprep.subr.bf16.mxu0 0
      %664 = vmatpush1.bf16.msra.mxu0 0
      %665 = vmatprep.subr.bf16.mxu0 0
      %666 = vmatpush1.bf16.msra.mxu0 0
      %667 = vmatprep.subr.bf16.mxu0 %v457
      %668 = vmatpush1.bf16.msra.mxu0 %v456
      %669 = vmatprep.subr.bf16.mxu0 %v455
      %670 = vmatpush1.bf16.msra.mxu0 %v454
      %671 = vmatprep.subr.bf16.mxu0 %v453
      %672 = vmatpush1.bf16.msra.mxu0 %v452
      %673 = vmatprep.subr.bf16.mxu0 %v451
      %674 = vmatpush1.bf16.msra.mxu0 %v450
      %675 = vmatprep.subr.bf16.mxu0 0
      %676 = vmatpush2.bf16.msra.mxu0 0
      %677 = vmatprep.subr.bf16.mxu0 0
      %678 = vmatpush2.bf16.msra.mxu0 0
      %679 = vmatprep.subr.bf16.mxu0 0
      %680 = vmatpush2.bf16.msra.mxu0 0
      %681 = vmatprep.subr.bf16.mxu0 0
      %682 = vmatpush2.bf16.msra.mxu0 0
      %683 = vmatprep.subr.bf16.mxu0 0
      %684 = vmatpush2.bf16.msra.mxu0 0
      %685 = vmatprep.subr.bf16.mxu0 0
      %686 = vmatpush2.bf16.msra.mxu0 0
      %687 = vmatprep.subr.bf16.mxu0 0
      %688 = vmatpush2.bf16.msra.mxu0 0
      %689 = vmatprep.subr.bf16.mxu0 0
      %690 = vmatpush2.bf16.msra.mxu0 0
      %691 = vmatprep.mubr.bf16.mxu0 0
      %692 = vmatmul.mubr.bf16.gmra.mxu0 %v657
      %v693 = vpop.f32.mrf.mxu0
      %v694 = vadd.f32 0.0, %v693
      %v695 = vpop.f32.mrf.mxu0
      %v696 = vadd.f32 0.0, %v695
      %v697 = vpop.f32.mrf.mxu0
      %v698 = vpop.f32.mrf.mxu0
      %699 = vdwg.mxu0
      %v700 = vadd.f32 %v648, %v694
      %v701 = vadd.f32 %v649, %v696
      %v702 = vxor.u32 %v700, 2147483648
      %v703 = vmul.f32 %v702, 1.442695
      %v704 = vpow.pop %v703
      %v705 = vadd.f32 %v704, 1.0
      %v706 = vrcp.pop %v705
      %v707 = vmul.f32 1.0, %v706
      %v708 = vtanh.pop %v701
      %v709 = vxor.u32 %v701, 2147483648
      %v710 = vmul.f32 %v709, 1.442695
      %v711 = vpow.pop %v710
      %v712 = vadd.f32 %v711, 1.0
      %v713 = vrcp.pop %v712
      %v714 = vmul.f32 1.0, %v713
      %v715 = vmul.f32 %v707, %v532
      %v716 = vmul.f32 %v707, %v708
      %718 = vrot.lane.b32.xlu0 %v716, 64
      %v719 = vpop.permute.xlu0 %718
      %v721 = vadd.f32 %v715, %v719
      %v722 = vtanh.pop %v721
      %v723 = vmul.f32 %v714, %v722
      %v724 = vpack.c.bf16 %v639, %v639
      %726 = vrot.lane.b32.xlu0 %v724, 64
      %v727 = vpop.permute.xlu0 %726
      %v729 = vsel %vm466, %v727, 0
      %731 = vmatprep.subr.bf16.mxu0 0
      %732 = vmatpush1.bf16.msra.mxu0 0
      %733 = vmatprep.subr.bf16.mxu0 0
      %734 = vmatpush1.bf16.msra.mxu0 0
      %735 = vmatprep.subr.bf16.mxu0 0
      %736 = vmatpush1.bf16.msra.mxu0 0
      %737 = vmatprep.subr.bf16.mxu0 0
      %738 = vmatpush1.bf16.msra.mxu0 0
      %739 = vmatprep.subr.bf16.mxu0 %v566
      %740 = vmatpush1.bf16.msra.mxu0 %v565
      %741 = vmatprep.subr.bf16.mxu0 %v564
      %742 = vmatpush1.bf16.msra.mxu0 %v563
      %743 = vmatprep.subr.bf16.mxu0 %v562
      %744 = vmatpush1.bf16.msra.mxu0 %v561
      %745 = vmatprep.subr.bf16.mxu0 %v560
      %746 = vmatpush1.bf16.msra.mxu0 %v559
      %747 = vmatprep.subr.bf16.mxu0 0
      %748 = vmatpush2.bf16.msra.mxu0 0
      %749 = vmatprep.subr.bf16.mxu0 0
      %750 = vmatpush2.bf16.msra.mxu0 0
      %751 = vmatprep.subr.bf16.mxu0 0
      %752 = vmatpush2.bf16.msra.mxu0 0
      %753 = vmatprep.subr.bf16.mxu0 0
      %754 = vmatpush2.bf16.msra.mxu0 0
      %755 = vmatprep.subr.bf16.mxu0 0
      %756 = vmatpush2.bf16.msra.mxu0 0
      %757 = vmatprep.subr.bf16.mxu0 0
      %758 = vmatpush2.bf16.msra.mxu0 0
      %759 = vmatprep.subr.bf16.mxu0 0
      %760 = vmatpush2.bf16.msra.mxu0 0
      %761 = vmatprep.subr.bf16.mxu0 0
      %762 = vmatpush2.bf16.msra.mxu0 0
      %763 = vmatprep.mubr.bf16.mxu0 0
      %764 = vmatmul.mubr.bf16.gmra.mxu0 %v729
      %v765 = vpop.f32.mrf.mxu0
      %v766 = vadd.f32 0.0, %v765
      %v767 = vpop.f32.mrf.mxu0
      %v768 = vadd.f32 0.0, %v767
      %v769 = vpop.f32.mrf.mxu0
      %v770 = vpop.f32.mrf.mxu0
      %771 = vdwg.mxu0
      %v772 = vadd.f32 %v650, %v766
      %v773 = vadd.f32 %v651, %v768
      %v774 = vxor.u32 %v772, 2147483648
      %v775 = vmul.f32 %v774, 1.442695
      %v776 = vpow.pop %v775
      %v777 = vadd.f32 %v776, 1.0
      %v778 = vrcp.pop %v777
      %v779 = vmul.f32 1.0, %v778
      %v780 = vtanh.pop %v773
      %v781 = vxor.u32 %v773, 2147483648
      %v782 = vmul.f32 %v781, 1.442695
      %v783 = vpow.pop %v782
      %v784 = vadd.f32 %v783, 1.0
      %v785 = vrcp.pop %v784
      %v786 = vmul.f32 1.0, %v785
      %v787 = vmul.f32 %v779, %v637
      %v788 = vmul.f32 %v779, %v780
      %790 = vrot.lane.b32.xlu0 %v788, 64
      %v791 = vpop.permute.xlu0 %790
      %v793 = vadd.f32 %v787, %v791
      %v794 = vtanh.pop %v793
      %v795 = vmul.f32 %v786, %v794
      %797 = vrot.lane.b32.xlu0 %v723, 64
      %v798 = vpop.permute.xlu0 %797
      %s800 = scalar_lea.vmem [#allocation3], 8
      %801 = vst.msk [vmem:[%s800] sm:$0xff] %vm466, %v798
      %802 = vst.msk [vmem:[%s800] sm:$0xff] %vm646, %v795
      %v803 = vld [vmem:[#allocation2 + $0x40] sm:$0xff]
      %v804 = vld [vmem:[#allocation2 + $0x48] sm:$0xff]
      %v805 = vld [vmem:[#allocation2 + $0x10] sm:$0xff]
      %v806 = vld [vmem:[#allocation2 + $0x18] sm:$0xff]
      %v807 = vpack.c.bf16 %v723, %v723
      %809 = vrot.lane.b32.xlu0 %v807, 64
      %v810 = vpop.permute.xlu0 %809
      %v812 = vsel %vm466, %v810, 0
      %814 = vmatprep.subr.bf16.mxu0 0
      %815 = vmatpush1.bf16.msra.mxu0 0
      %816 = vmatprep.subr.bf16.mxu0 0
      %817 = vmatpush1.bf16.msra.mxu0 0
      %818 = vmatprep.subr.bf16.mxu0 0
      %819 = vmatpush1.bf16.msra.mxu0 0
      %820 = vmatprep.subr.bf16.mxu0 0
      %821 = vmatpush1.bf16.msra.mxu0 0
      %822 = vmatprep.subr.bf16.mxu0 %v457
      %823 = vmatpush1.bf16.msra.mxu0 %v456
      %824 = vmatprep.subr.bf16.mxu0 %v455
      %825 = vmatpush1.bf16.msra.mxu0 %v454
      %826 = vmatprep.subr.bf16.mxu0 %v453
      %827 = vmatpush1.bf16.msra.mxu0 %v452
      %828 = vmatprep.subr.bf16.mxu0 %v451
      %829 = vmatpush1.bf16.msra.mxu0 %v450
      %830 = vmatprep.subr.bf16.mxu0 0
      %831 = vmatpush2.bf16.msra.mxu0 0
      %832 = vmatprep.subr.bf16.mxu0 0
      %833 = vmatpush2.bf16.msra.mxu0 0
      %834 = vmatprep.subr.bf16.mxu0 0
      %835 = vmatpush2.bf16.msra.mxu0 0
      %836 = vmatprep.subr.bf16.mxu0 0
      %837 = vmatpush2.bf16.msra.mxu0 0
      %838 = vmatprep.subr.bf16.mxu0 0
      %839 = vmatpush2.bf16.msra.mxu0 0
      %840 = vmatprep.subr.bf16.mxu0 0
      %841 = vmatpush2.bf16.msra.mxu0 0
      %842 = vmatprep.subr.bf16.mxu0 0
      %843 = vmatpush2.bf16.msra.mxu0 0
      %844 = vmatprep.subr.bf16.mxu0 0
      %845 = vmatpush2.bf16.msra.mxu0 0
      %846 = vmatprep.mubr.bf16.mxu0 0
      %847 = vmatmul.mubr.bf16.gmra.mxu0 %v812
      %v848 = vpop.f32.mrf.mxu0
      %v849 = vadd.f32 0.0, %v848
      %v850 = vpop.f32.mrf.mxu0
      %v851 = vadd.f32 0.0, %v850
      %v852 = vpop.f32.mrf.mxu0
      %v853 = vpop.f32.mrf.mxu0
      %854 = vdwg.mxu0
      %v855 = vadd.f32 %v803, %v849
      %v856 = vadd.f32 %v804, %v851
      %v857 = vxor.u32 %v855, 2147483648
      %v858 = vmul.f32 %v857, 1.442695
      %v859 = vpow.pop %v858
      %v860 = vadd.f32 %v859, 1.0
      %v861 = vrcp.pop %v860
      %v862 = vmul.f32 1.0, %v861
      %v863 = vtanh.pop %v856
      %v864 = vxor.u32 %v856, 2147483648
      %v865 = vmul.f32 %v864, 1.442695
      %v866 = vpow.pop %v865
      %v867 = vadd.f32 %v866, 1.0
      %v868 = vrcp.pop %v867
      %v869 = vmul.f32 1.0, %v868
      %v870 = vmul.f32 %v862, %v721
      %v871 = vmul.f32 %v862, %v863
      %873 = vrot.lane.b32.xlu0 %v871, 64
      %v874 = vpop.permute.xlu0 %873
      %v876 = vadd.f32 %v870, %v874
      %v877 = vtanh.pop %v876
      %v878 = vmul.f32 %v869, %v877
      %v879 = vpack.c.bf16 %v795, %v795
      %881 = vrot.lane.b32.xlu0 %v879, 64
      %v882 = vpop.permute.xlu0 %881
      %v884 = vsel %vm466, %v882, 0
      %886 = vmatprep.subr.bf16.mxu0 0
      %887 = vmatpush1.bf16.msra.mxu0 0
      %888 = vmatprep.subr.bf16.mxu0 0
      %889 = vmatpush1.bf16.msra.mxu0 0
      %890 = vmatprep.subr.bf16.mxu0 0
      %891 = vmatpush1.bf16.msra.mxu0 0
      %892 = vmatprep.subr.bf16.mxu0 0
      %893 = vmatpush1.bf16.msra.mxu0 0
      %894 = vmatprep.subr.bf16.mxu0 %v566
      %895 = vmatpush1.bf16.msra.mxu0 %v565
      %896 = vmatprep.subr.bf16.mxu0 %v564
      %897 = vmatpush1.bf16.msra.mxu0 %v563
      %898 = vmatprep.subr.bf16.mxu0 %v562
      %899 = vmatpush1.bf16.msra.mxu0 %v561
      %900 = vmatprep.subr.bf16.mxu0 %v560
      %901 = vmatpush1.bf16.msra.mxu0 %v559
      %902 = vmatprep.subr.bf16.mxu0 0
      %903 = vmatpush2.bf16.msra.mxu0 0
      %904 = vmatprep.subr.bf16.mxu0 0
      %905 = vmatpush2.bf16.msra.mxu0 0
      %906 = vmatprep.subr.bf16.mxu0 0
      %907 = vmatpush2.bf16.msra.mxu0 0
      %908 = vmatprep.subr.bf16.mxu0 0
      %909 = vmatpush2.bf16.msra.mxu0 0
      %910 = vmatprep.subr.bf16.mxu0 0
      %911 = vmatpush2.bf16.msra.mxu0 0
      %912 = vmatprep.subr.bf16.mxu0 0
      %913 = vmatpush2.bf16.msra.mxu0 0
      %914 = vmatprep.subr.bf16.mxu0 0
      %915 = vmatpush2.bf16.msra.mxu0 0
      %916 = vmatprep.subr.bf16.mxu0 0
      %917 = vmatpush2.bf16.msra.mxu0 0
      %918 = vmatprep.mubr.bf16.mxu0 0
      %919 = vmatmul.mubr.bf16.gmra.mxu0 %v884
      %v920 = vpop.f32.mrf.mxu0
      %v921 = vadd.f32 0.0, %v920
      %v922 = vpop.f32.mrf.mxu0
      %v923 = vadd.f32 0.0, %v922
      %v924 = vpop.f32.mrf.mxu0
      %v925 = vpop.f32.mrf.mxu0
      %926 = vdwg.mxu0
      %v927 = vadd.f32 %v805, %v921
      %v928 = vadd.f32 %v806, %v923
      %v929 = vxor.u32 %v927, 2147483648
      %v930 = vmul.f32 %v929, 1.442695
      %v931 = vpow.pop %v930
      %v932 = vadd.f32 %v931, 1.0
      %v933 = vrcp.pop %v932
      %v934 = vmul.f32 1.0, %v933
      %v935 = vtanh.pop %v928
      %v936 = vxor.u32 %v928, 2147483648
      %v937 = vmul.f32 %v936, 1.442695
      %v938 = vpow.pop %v937
      %v939 = vadd.f32 %v938, 1.0
      %v940 = vrcp.pop %v939
      %v941 = vmul.f32 1.0, %v940
      %v942 = vmul.f32 %v934, %v793
      %v943 = vmul.f32 %v934, %v935
      %945 = vrot.lane.b32.xlu0 %v943, 64
      %v946 = vpop.permute.xlu0 %945
      %v948 = vadd.f32 %v942, %v946
      %v949 = vtanh.pop %v948
      %v950 = vmul.f32 %v941, %v949
      %952 = vrot.lane.b32.xlu0 %v878, 64
      %v953 = vpop.permute.xlu0 %952
      %955 = vst.msk [vmem:[%s645] sm:$0xff] %vm466, %v953
      %956 = vst.msk [vmem:[#allocation3] sm:$0xff] %vm646, %v950
    $region29: #{lstm_block_forward.1} parent=1 // pred_fallthru
      _
    // Predicated region
    $region30: #{lstm_block_forward.1} parent=1 // pred_check
      _
    $region31: #{lstm_block_forward.1} parent=1 // pred_check_branch
      %958 = sbr.rel (0) target = $region33
    $region32: #{lstm_block_forward.1} parent=1 // pred_region
      %s960 = ssub.s32 384, 384
      %961 = vsyncadd [#allocation4], %s960
      %s962 = sshll.u32 [#allocation3], 4
      %s963 = int_to_ptr.vmem [resolvable:$true] %s962
      %968 = dma.vmem_to_hbm [thread:$0]  %s963, 384, %s5, [#allocation4], 128, 128, 8
    $region33: #{lstm_block_forward.1} parent=1 // pred_fallthru
      _
    // Predicated region
    $region34: #{lstm_block_forward.1} parent=1 // pred_check
      _
    $region35: #{lstm_block_forward.1} parent=1 // pred_check_branch
      %970 = sbr.rel (0) target = $region37
    $region36: #{lstm_block_forward.1} parent=1 // pred_region
      %971 = dma.done [#allocation4], 384
    $region37: #{lstm_block_forward.1} parent=1 // pred_fallthru
      _
    %972 = vsyncpa [#allocation4], 1

</llo_original>
